<compile_context>
chip_gen: v7x
topology: tpu7x:2x2x1
jax: 0.10.0
libtpu: 0.0.40
codegen_flags: <defaults>
</compile_context>

<pallas_src>
import math

import numpy as np
import jax
import jax.numpy as jnp
from jax.experimental import pallas as pl
from jax.experimental.pallas import tpu as pltpu


def _copy_kernel(x_ref, o_ref):
    # Full-tile, lane-dense copy of the current block.
    o_ref[...] = x_ref[...]


# Per-buffer tile budget (bytes).  1 input + 1 output, each double-buffered,
# => 4 live buffers of <= 8 MiB apiece.
_TILE_BYTES_CAP = 8 * 1024 * 1024

_LANE = 128
_SUBLANE = 8


def _choose_layout(shape, itemsize):
    """Pick a lane-dense (rows, cols) 2D view and a row-tile size.

    Returns ((rows, cols), row_block), or (None, None) when the element count
    is not a multiple of 128 (caller falls back to one full-extent block,
    which always satisfies the block-shape divisibility rules).
    """
    total = math.prod(shape) if shape else 1
    if total == 0:
        return None, None
    best = None
    for cols in (16 * _LANE, 8 * _LANE, 4 * _LANE, 2 * _LANE, _LANE):
        if total % cols != 0:
            continue
        rows = total // cols
        if best is None:
            best = (rows, cols)          # widest lane-dense option
        if rows % _SUBLANE == 0:
            best = (rows, cols)          # prefer sublane-aligned row count
            break
    if best is None:
        return None, None

    rows, cols = best
    cap = max(_SUBLANE,
              (_TILE_BYTES_CAP // (cols * itemsize)) // _SUBLANE * _SUBLANE)
    if rows <= cap:
        return (rows, cols), rows        # single grid step
    if rows % cap == 0:
        return (rows, cols), cap
    for rb in range(cap, _SUBLANE - 1, -_SUBLANE):
        if rows % rb == 0:
            return (rows, cols), rb
    return (rows, cols), rows            # no even split: one big step


def debug_forward(x: jax.Array, should_break: bool = False) -> jax.Array:
    """Pallas equivalent of Debug.forward: print the shape, return x."""
    # Mirrors `print(X.size())`.  Shapes are static, so a trace-time host
    # print is the faithful equivalent even under jit.
    print(tuple(x.shape))
    # TODO(synk): `breakpoint()` (should_break=True) has no Pallas equivalent.

    orig_shape = x.shape
    layout, row_block = _choose_layout(orig_shape, x.dtype.itemsize)

    if layout is None:
        # Element count not a multiple of 128 (or 0-d input): present a
        # single full-extent (1, total) block, which is always legal.
        total = math.prod(orig_shape) if orig_shape else 1
        view = x.reshape(1, total)
        block = (1, total)
        grid = (1,)
        index_map = lambda i: (0, 0)
    else:
        rows, cols = layout
        view = x.reshape(rows, cols)      # contiguous: layout-only reshape
        block = (row_block, cols)
        grid = (rows // row_block,)
        index_map = lambda i: (i, 0)

    cost = pl.CostEstimate(
        flops=0,
        transcendentals=0,
        bytes_accessed=2 * x.size * x.dtype.itemsize,
    )

    out = pl.pallas_call(
        _copy_kernel,
        out_shape=jax.ShapeDtypeStruct(view.shape, view.dtype),
        grid_spec=pltpu.PrefetchScalarGridSpec(
            num_scalar_prefetch=0,
            grid=grid,
            in_specs=[pl.BlockSpec(block, index_map)],
            out_specs=pl.BlockSpec(block, index_map),
        ),
        compiler_params=pltpu.CompilerParams(
            # "parallel" lets Mosaic shard grid steps across v7x's 2 TCs;
            # near-zero measured effect on single-TC v5e/v6e.
            dimension_semantics=("parallel",),
            vmem_limit_bytes=48 * 1024 * 1024,
        ),
        cost_estimate=cost,
        # Identity op: alias input 0 -> output 0 so no new HBM buffer is
        # needed when the caller (under jit) donates the input.
        input_output_aliases={0: 0},
    )(view)

    return out.reshape(orig_shape)


if __name__ == "__main__":
    key = jax.random.PRNGKey(0)
    # Small NCHW input consistent with a typical conv-style activation.
    x = jax.random.normal(key, (2, 4, 16, 16), dtype=jnp.float32)
    x_host = np.asarray(x)   # host copy: robust to input/output aliasing

    y = debug_forward(x, should_break=False)
    y = jax.block_until_ready(y)

    # Identity semantics check.
    assert y.shape == x_host.shape
    assert y.dtype == x_host.dtype
    assert np.array_equal(np.asarray(y), x_host)

    print("KERNEL_OK")
</pallas_src>

<mosaic_0001>
module attributes {stable_mosaic.version = 11 : i64} {
  func.func @_copy_kernel(%arg0: i32, %arg1: memref<8x256xf32, #tpu.memory_space<vmem>>, %arg2: memref<8x256xf32, #tpu.memory_space<vmem>>) attributes {dimension_semantics = [#tpu.dimension_semantics<parallel>], iteration_bounds = array<i64: 1>, scalar_prefetch = 0 : i64, scratch_operands = 0 : i64, tpu.core_type = #tpu.core_type<tc>, window_params = [{transform_indices = @transform_0, window_bounds = array<i64: 8, 256>}, {transform_indices = @transform_1, window_bounds = array<i64: 8, 256>}]} {
    %c0 = arith.constant 0 : index
    %c0_0 = arith.constant 0 : index
    %0 = vector.load %arg1[%c0, %c0_0] : memref<8x256xf32, #tpu.memory_space<vmem>>, vector<8x256xf32>
    %c0_1 = arith.constant 0 : index
    %c0_2 = arith.constant 0 : index
    %1 = vector.load %arg2[%c0_1, %c0_2] : memref<8x256xf32, #tpu.memory_space<vmem>>, vector<8x256xf32>
    tpu.vector_store %arg2[%c0_1, %c0_2], %0 {strides = array<i32>} : memref<8x256xf32, #tpu.memory_space<vmem>>, vector<8x256xf32>,
    return
  }
  func.func @transform_0(%arg0: i32) -> (i32, i32) {
    %c0_i32 = arith.constant 0 : i32
    %c0_i32_0 = arith.constant 0 : i32
    return %arg0, %c0_i32 : i32, i32
  }
  func.func @transform_1(%arg0: i32) -> (i32, i32) {
    %c0_i32 = arith.constant 0 : i32
    %c0_i32_0 = arith.constant 0 : i32
    return %arg0, %c0_i32 : i32, i32
  }
}

</mosaic_0001>

<llo_original>
// kernel: tpu_custom_call.1
$region0: #{tpu_custom_call.1}
  #allocation0 [shape = 'u32[]', space=smem, size = 0x4, offset = 0x4, fixed_abs, tag = 'smem constant byte address 0x4 - core index']
  #allocation1 [shape = 'u32[144,128]{1,0:T(1,128)}', space=vmem, size = 0x12000, scoped, tag = 'internal scratch']
  %s0 = inlined_call_operand.hbm [shape: f32[8,256], index: 0, kind: input, shape index: {}, may-alias: {0,1}]
  %s1 = inlined_call_operand.hbm [shape: f32[8,256], index: 1, kind: output, shape index: {}, may-alias: {0,1}]
  %s2 = sld [smem:[#allocation0]]
  $region18: #{tpu_custom_call.1} parent=0
    _
  %s4 = ssub.s32 1, %s2
  %s5 = scalar_select 0, %s4, %s2
  $region1: #{tpu_custom_call.1} parent=0
    #allocation2 [shape = 'u8[8192]{0}', space=vmem, size = 0x2000, scoped, tag = 'input window, operand 0, single buffered']
    #allocation3 [shape = 's32[1]{0}', space=sflag, size = 0x4, scoped, tag = 'scoped memory for tpu_custom_call.1']
    #allocation4 [shape = 's32[1]{0}', space=sflag, size = 0x4, scoped, tag = 'scoped memory for tpu_custom_call.1']
    #allocation5 [shape = 'u8[8192]{0}', space=vmem, size = 0x2000, scoped, tag = 'output window, operand 0, single buffered']
    %6 = vsyncpa [#allocation3], 0
    %7 = vsyncpa [#allocation4], 0
    // Predicated region
    $region2: #{tpu_custom_call.1} parent=1 // pred_check
      _
    $region3: #{tpu_custom_call.1} parent=1 // pred_check_branch
      %9 = sbr.rel (0) target = $region5
    $region4: #{tpu_custom_call.1} parent=1 // pred_region
      %s11 = ssub.s32 256, 256
      %12 = vsyncadd [#allocation3], %s11
      %s14 = sshll.u32 [#allocation2], 4
      %s15 = int_to_ptr.vmem [resolvable:$true] %s14
      %17 = dma.hbm_to_vmem [thread:$0]  %s0, 256, %s15, [#allocation3]
    $region5: #{tpu_custom_call.1} parent=1 // pred_fallthru
      _
    // Predicated region
    $region6: #{tpu_custom_call.1} parent=1 // pred_check
      _
    $region7: #{tpu_custom_call.1} parent=1 // pred_check_branch
      %19 = sbr.rel (0) target = $region9
    $region8: #{tpu_custom_call.1} parent=1 // pred_region
      %20 = dma.done [#allocation3], 256
    $region9: #{tpu_custom_call.1} parent=1 // pred_fallthru
      _
    %v21 = vld [vmem:[#allocation2] sm:$0xff]
    %v22 = vld [vmem:[#allocation2 + $0x8] sm:$0xff]
    %23 = vst [vmem:[#allocation5] sm:$0xff] %v21
    %24 = vst [vmem:[#allocation5 + $0x8] sm:$0xff] %v22
    // Predicated region
    $region10: #{tpu_custom_call.1} parent=1 // pred_check
      _
    $region11: #{tpu_custom_call.1} parent=1 // pred_check_branch
      %26 = sbr.rel (0) target = $region13
    $region12: #{tpu_custom_call.1} parent=1 // pred_region
      %s28 = ssub.s32 256, 256
      %29 = vsyncadd [#allocation4], %s28
      %s31 = sshll.u32 [#allocation5], 4
      %s32 = int_to_ptr.vmem [resolvable:$true] %s31
      %34 = dma.vmem_to_hbm [thread:$0]  %s32, 256, %s1, [#allocation4]
    $region13: #{tpu_custom_call.1} parent=1 // pred_fallthru
      _
    // Predicated region
    $region14: #{tpu_custom_call.1} parent=1 // pred_check
      _
    $region15: #{tpu_custom_call.1} parent=1 // pred_check_branch
      %36 = sbr.rel (0) target = $region17
    $region16: #{tpu_custom_call.1} parent=1 // pred_region
      %37 = dma.done [#allocation4], 256
    $region17: #{tpu_custom_call.1} parent=1 // pred_fallthru
      _
    %38 = vsyncpa [#allocation3], 1
    %39 = vsyncpa [#allocation4], 1

</llo_original>
